<compile_context>
chip_gen: v5e
topology: v5e:2x2
jax: 0.10.0
libtpu: 0.0.40
codegen_flags: <defaults>
</compile_context>

<pallas_src>
import math
import functools

import jax
import jax.numpy as jnp
from jax import lax
from jax.experimental import pallas as pl
from jax.experimental.pallas import tpu as pltpu


def _mha_kernel(x_ref, wqkv_ref, wout_ref, o_ref, *, S, H, F, causal):
    # x_ref:    (S, D)   f32   one batch element (grid axis = batch, "parallel")
    # wqkv_ref: (D, 3D)  bf16  [Q | K | V] fused; 1/sqrt(F) folded into Q cols
    # wout_ref: (D, D)   bf16  transposed nn.Linear weight (y = h @ wout_ref)
    # o_ref:    (S, D)   f32
    D = H * F

    # ---- fused QKV projection: one lane-dense bf16 MXU matmul (K=D, N=3D) ----
    x = x_ref[...].astype(jnp.bfloat16)
    qkv = lax.dot_general(
        x, wqkv_ref[...],
        dimension_numbers=(((1,), (0,)), ((), ())),
        preferred_element_type=jnp.float32)                # (S, 3D) f32

    # ---- in-kernel causal additive mask (no HBM mask DMA / VMEM buffer) ----
    if causal:
        row = lax.broadcasted_iota(jnp.int32, (S, S), 0)
        col = lax.broadcasted_iota(jnp.int32, (S, S), 1)
        neg = jnp.where(col <= row, 0.0, -1e9).astype(jnp.float32)
    else:
        neg = None
    # TODO(synk): arbitrary user-supplied additive masks (beyond the standard
    # causal mask) are not plumbed into the kernel.

    # ---- per-head attention with an ACCUMULATED output projection ----
    # out = sum_h softmax(q_h k_h^T + mask) v_h @ W_out^T[hF:(h+1)F, :]
    # -> no concatenation, every MXU result / store is lane-dense (D = 128).
    acc = jnp.zeros((S, D), jnp.float32)
    for h in range(H):                                     # H small, unrolls
        q = qkv[:, h * F:(h + 1) * F].astype(jnp.bfloat16)                  # (S,F)
        k = qkv[:, D + h * F:D + (h + 1) * F].astype(jnp.bfloat16)          # (S,F)
        v = qkv[:, 2 * D + h * F:2 * D + (h + 1) * F].astype(jnp.bfloat16)  # (S,F)

        # bf16 QK^T on the MXU, f32 accumulation (scale already in Q weights).
        s = lax.dot_general(
            q, k, dimension_numbers=(((1,), (1,)), ((), ())),
            preferred_element_type=jnp.float32)            # (S, S) f32
        if neg is not None:
            s = s + neg

        # numerically stable softmax in f32; EUP approximate reciprocal
        m = jnp.max(s, axis=-1, keepdims=True)
        p = jnp.exp(s - m)
        attn = p * pl.reciprocal(jnp.sum(p, axis=-1, keepdims=True),
                                 approx=True)

        head_out = jnp.dot(attn.astype(jnp.bfloat16), v,
                           preferred_element_type=jnp.float32)   # (S, F) f32

        # accumulate the output projection: (S,F) @ (F,D) -> lane-dense (S,D)
        acc = acc + jnp.dot(head_out.astype(jnp.bfloat16),
                            wout_ref[h * F:(h + 1) * F, :],
                            preferred_element_type=jnp.float32)

    o_ref[...] = acc.astype(o_ref.dtype)


def mha_forward(x_sbd, w_q, w_k, w_v, w_out, *, causal=True):
    """Pallas forward of MultiHeadAttention (bayes=False).

    Args:
      x_sbd: (S, B, d_model) f32 — same axis convention as the PyTorch module.
      w_q, w_k, w_v: (n_heads, d_head, d_model) f32 per-head nn.Linear weights.
      w_out: (d_model, d_model) f32 nn.Linear weight (bias=False).
      causal: apply the standard causal mask (matches the module when the
        caller passes the usual 0/-1e9 additive mask).
    Returns:
      (S, B, d_model) f32.
    """
    S, B, D = x_sbd.shape
    H, F, _ = w_q.shape
    assert H * F == D, "d_model must equal n_heads * d_head"
    scale = 1.0 / math.sqrt(F)

    # (S, B, D) -> (B, S, D): one wrapper transpose forced by the module's
    # seq-major layout.
    x_bsd = jnp.transpose(x_sbd, (1, 0, 2))

    # One-time weight prep: fuse all heads' Q/K/V weights into (D, 3D) bf16
    # and fold the 1/sqrt(F) scale into the Q columns.
    wq_all = jnp.concatenate([w_q[h].T for h in range(H)], axis=1) * scale  # (D,D)
    wk_all = jnp.concatenate([w_k[h].T for h in range(H)], axis=1)
    wv_all = jnp.concatenate([w_v[h].T for h in range(H)], axis=1)
    w_qkv = jnp.concatenate([wq_all, wk_all, wv_all], axis=1).astype(jnp.bfloat16)
    w_out_t = w_out.T.astype(jnp.bfloat16)                                  # (D,D)

    kernel = functools.partial(_mha_kernel, S=S, H=H, F=F, causal=causal)

    out_bsd = pl.pallas_call(
        kernel,
        out_shape=jax.ShapeDtypeStruct((B, S, D), jnp.float32),
        grid_spec=pltpu.PrefetchScalarGridSpec(
            num_scalar_prefetch=0,
            grid=(B,),                                   # one step per batch
            in_specs=[
                pl.BlockSpec((None, S, D), lambda b: (b, 0, 0)),   # x block
                pl.BlockSpec((D, 3 * D), lambda b: (0, 0)),        # resident w
                pl.BlockSpec((D, D), lambda b: (0, 0)),            # resident w
            ],
            out_specs=pl.BlockSpec((None, S, D), lambda b: (b, 0, 0)),
        ),
        compiler_params=pltpu.CompilerParams(
            dimension_semantics=("parallel",)),          # megacore / 2 TCs
    )(x_bsd, w_qkv, w_out_t)

    # (B, S, D) -> (S, B, D)
    return jnp.transpose(out_bsd, (1, 0, 2))


def _reference(x_sbd, w_q, w_k, w_v, w_out, mask, causal=True):
    # pure-JAX f32 mirror of the PyTorch MultiHeadAttention forward (bayes=False)
    H, F, _ = w_q.shape
    outs = []
    for h in range(H):
        Q = x_sbd @ w_q[h].T          # (S, B, F)
        K = x_sbd @ w_k[h].T
        V = x_sbd @ w_v[h].T
        Qb = jnp.transpose(Q, (1, 0, 2))
        Kb = jnp.transpose(K, (1, 0, 2))
        Vb = jnp.transpose(V, (1, 0, 2))
        scores = Qb @ jnp.transpose(Kb, (0, 2, 1)) / math.sqrt(F)
        if causal and mask is not None:
            scores = scores + mask
        attn = jax.nn.softmax(scores, axis=-1)
        o = attn @ Vb                 # (B, S, F)
        outs.append(jnp.transpose(o, (1, 0, 2)))
    heads_out = jnp.concatenate(outs, axis=-1)   # (S, B, D)
    return heads_out @ w_out.T


if __name__ == "__main__":
    # small shapes consistent with the module: seq=8, batch=2, d_model=128,
    # n_heads=4 (d_head=32) so every kernel store is lane-dense (128 lanes).
    S, B, D_MODEL, N_HEADS = 8, 2, 128, 4
    D_HEAD = D_MODEL // N_HEADS

    key = jax.random.PRNGKey(0)
    kx, kq, kk, kv, ko = jax.random.split(key, 5)

    x = jax.random.normal(kx, (S, B, D_MODEL), dtype=jnp.float32)
    # deterministic nn.Linear-style init (bias=False): U(-1/sqrt(fan_in), +)
    bound = 1.0 / math.sqrt(D_MODEL)
    w_q = jax.random.uniform(kq, (N_HEADS, D_HEAD, D_MODEL), jnp.float32, -bound, bound)
    w_k = jax.random.uniform(kk, (N_HEADS, D_HEAD, D_MODEL), jnp.float32, -bound, bound)
    w_v = jax.random.uniform(kv, (N_HEADS, D_HEAD, D_MODEL), jnp.float32, -bound, bound)
    w_out = jax.random.uniform(ko, (D_MODEL, D_MODEL), jnp.float32, -bound, bound)

    # standard causal additive mask as PyTorch callers pass (used by reference;
    # the kernel regenerates it in-kernel from iotas)
    causal_mask = jnp.where(
        jnp.arange(S)[:, None] >= jnp.arange(S)[None, :], 0.0, -1e9
    ).astype(jnp.float32)

    # TODO(synk): bayes=True path (F.dropout with training=True) not implemented;
    # this kernel covers the default bayes=False forward.

    out = mha_forward(x, w_q, w_k, w_v, w_out, causal=True)
    out = jax.block_until_ready(out)

    ref = _reference(x, w_q, w_k, w_v, w_out, causal_mask, causal=True)
    assert out.shape == (S, B, D_MODEL)
    # bf16 MXU inputs + approx reciprocal => loosened tolerance vs f32 reference
    assert jnp.allclose(out, ref, atol=5e-2, rtol=5e-2)

    print("KERNEL_OK")
</pallas_src>

<mosaic_0001>
module attributes {stable_mosaic.version = 11 : i64} {
  func.func @_mha_kernel(%arg0: i32, %arg1: memref<1x8x128xf32, #tpu.memory_space<vmem>>, %arg2: memref<128x384xbf16, #tpu.memory_space<vmem>>, %arg3: memref<128x128xbf16, #tpu.memory_space<vmem>>, %arg4: memref<1x8x128xf32, #tpu.memory_space<vmem>>) attributes {dimension_semantics = [#tpu.dimension_semantics<parallel>], iteration_bounds = array<i64: 2>, scalar_prefetch = 0 : i64, scratch_operands = 0 : i64, tpu.core_type = #tpu.core_type<tc>, window_params = [{transform_indices = @transform_0, window_bounds = array<i64: 1, 8, 128>}, {pipeline_mode = #tpu.pipeline_mode<synchronous>, transform_indices = @transform_1, window_bounds = array<i64: 128, 384>}, {pipeline_mode = #tpu.pipeline_mode<synchronous>, transform_indices = @transform_2, window_bounds = array<i64: 128, 128>}, {transform_indices = @transform_3, window_bounds = array<i64: 1, 8, 128>}]} {
    %c0 = arith.constant 0 : index
    %c0_0 = arith.constant 0 : index
    %c0_1 = arith.constant 0 : index
    %0 = vector.load %arg1[%c0, %c0_0, %c0_1] : memref<1x8x128xf32, #tpu.memory_space<vmem>>, vector<1x8x128xf32>
    %1 = vector.shape_cast %0 : vector<1x8x128xf32> to vector<8x128xf32>
    %2 = arith.truncf %1 : vector<8x128xf32> to vector<8x128xbf16>
    %c0_2 = arith.constant 0 : index
    %c0_3 = arith.constant 0 : index
    %3 = vector.load %arg2[%c0_2, %c0_3] : memref<128x384xbf16, #tpu.memory_space<vmem>>, vector<128x384xbf16>
    %cst = arith.constant dense<0.000000e+00> : vector<8x384xf32>
    %4 = tpu.matmul %2, %3, %cst {dimension_numbers = #tpu.dot_dimension_numbers<[1], [0], [0], [1], [0, 0, 1, 1], [], []>} : vector<8x128xbf16>, vector<128x384xbf16>, vector<8x384xf32> -> vector<8x384xf32>
    %5 = tpu.iota {dimensions = array<i32: 0>} : vector<8x8xi32>
    %6 = tpu.iota {dimensions = array<i32: 1>} : vector<8x8xi32>
    %7 = arith.cmpi sle, %6, %5 : vector<8x8xi32>
    %cst_4 = arith.constant 0.000000e+00 : f32
    %cst_5 = arith.constant -1.000000e+09 : f32
    %8 = vector.broadcast %cst_4 : f32 to vector<8x8xf32>
    %9 = vector.broadcast %cst_5 : f32 to vector<8x8xf32>
    %10 = arith.select %7, %8, %9 : vector<8x8xi1>, vector<8x8xf32>
    %cst_6 = arith.constant 0.000000e+00 : f32
    %11 = vector.broadcast %cst_6 : f32 to vector<8x128xf32>
    %12 = vector.extract_strided_slice %4 {offsets = [0, 0], sizes = [8, 32], strides = [1, 1]} : vector<8x384xf32> to vector<8x32xf32>
    %13 = arith.truncf %12 : vector<8x32xf32> to vector<8x32xbf16>
    %14 = vector.extract_strided_slice %4 {offsets = [0, 128], sizes = [8, 32], strides = [1, 1]} : vector<8x384xf32> to vector<8x32xf32>
    %15 = arith.truncf %14 : vector<8x32xf32> to vector<8x32xbf16>
    %16 = vector.extract_strided_slice %4 {offsets = [0, 256], sizes = [8, 32], strides = [1, 1]} : vector<8x384xf32> to vector<8x32xf32>
    %17 = arith.truncf %16 : vector<8x32xf32> to vector<8x32xbf16>
    %cst_7 = arith.constant dense<0.000000e+00> : vector<8x8xf32>
    %18 = tpu.matmul %13, %15, %cst_7 {dimension_numbers = #tpu.dot_dimension_numbers<[1], [1], [0], [0], [0, 0, 1, 0], [], []>} : vector<8x32xbf16>, vector<8x32xbf16>, vector<8x8xf32> -> vector<8x8xf32>
    %19 = arith.addf %18, %10 : vector<8x8xf32>
    %cst_8 = arith.constant dense<0xFF800000> : vector<8xf32>
    %20 = vector.multi_reduction <maximumf>, %19, %cst_8 [1] : vector<8x8xf32> to vector<8xf32>
    %21 = vector.shape_cast %20 : vector<8xf32> to vector<8x1xf32>
    %22 = vector.broadcast %21 : vector<8x1xf32> to vector<8x8xf32>
    %23 = arith.subf %19, %22 : vector<8x8xf32>
    %24 = math.exp %23 : vector<8x8xf32>
    %cst_9 = arith.constant dense<0.000000e+00> : vector<8xf32>
    %25 = vector.multi_reduction <add>, %24, %cst_9 [1] : vector<8x8xf32> to vector<8xf32>
    %26 = vector.shape_cast %25 : vector<8xf32> to vector<8x1xf32>
    %27 = tpu.reciprocal %26 {approx = true} : vector<8x1xf32> -> vector<8x1xf32>
    %28 = vector.broadcast %27 : vector<8x1xf32> to vector<8x8xf32>
    %29 = arith.mulf %24, %28 : vector<8x8xf32>
    %30 = arith.truncf %29 : vector<8x8xf32> to vector<8x8xbf16>
    %cst_10 = arith.constant dense<0.000000e+00> : vector<8x32xf32>
    %31 = tpu.matmul %30, %17, %cst_10 {dimension_numbers = #tpu.dot_dimension_numbers<[1], [0], [0], [1], [0, 0, 1, 1], [], []>} : vector<8x8xbf16>, vector<8x32xbf16>, vector<8x32xf32> -> vector<8x32xf32>
    %32 = arith.truncf %31 : vector<8x32xf32> to vector<8x32xbf16>
    %c0_11 = arith.constant 0 : index
    %c0_12 = arith.constant 0 : index
    %33 = vector.load %arg3[%c0_11, %c0_12] : memref<128x128xbf16, #tpu.memory_space<vmem>>, vector<32x128xbf16>
    %cst_13 = arith.constant dense<0.000000e+00> : vector<8x128xf32>
    %34 = tpu.matmul %32, %33, %cst_13 {dimension_numbers = #tpu.dot_dimension_numbers<[1], [0], [0], [1], [0, 0, 1, 1], [], []>} : vector<8x32xbf16>, vector<32x128xbf16>, vector<8x128xf32> -> vector<8x128xf32>
    %35 = arith.addf %11, %34 : vector<8x128xf32>
    %36 = vector.extract_strided_slice %4 {offsets = [0, 32], sizes = [8, 32], strides = [1, 1]} : vector<8x384xf32> to vector<8x32xf32>
    %37 = arith.truncf %36 : vector<8x32xf32> to vector<8x32xbf16>
    %38 = vector.extract_strided_slice %4 {offsets = [0, 160], sizes = [8, 32], strides = [1, 1]} : vector<8x384xf32> to vector<8x32xf32>
    %39 = arith.truncf %38 : vector<8x32xf32> to vector<8x32xbf16>
    %40 = vector.extract_strided_slice %4 {offsets = [0, 288], sizes = [8, 32], strides = [1, 1]} : vector<8x384xf32> to vector<8x32xf32>
    %41 = arith.truncf %40 : vector<8x32xf32> to vector<8x32xbf16>
    %cst_14 = arith.constant dense<0.000000e+00> : vector<8x8xf32>
    %42 = tpu.matmul %37, %39, %cst_14 {dimension_numbers = #tpu.dot_dimension_numbers<[1], [1], [0], [0], [0, 0, 1, 0], [], []>} : vector<8x32xbf16>, vector<8x32xbf16>, vector<8x8xf32> -> vector<8x8xf32>
    %43 = arith.addf %42, %10 : vector<8x8xf32>
    %cst_15 = arith.constant dense<0xFF800000> : vector<8xf32>
    %44 = vector.multi_reduction <maximumf>, %43, %cst_15 [1] : vector<8x8xf32> to vector<8xf32>
    %45 = vector.shape_cast %44 : vector<8xf32> to vector<8x1xf32>
    %46 = vector.broadcast %45 : vector<8x1xf32> to vector<8x8xf32>
    %47 = arith.subf %43, %46 : vector<8x8xf32>
    %48 = math.exp %47 : vector<8x8xf32>
    %cst_16 = arith.constant dense<0.000000e+00> : vector<8xf32>
    %49 = vector.multi_reduction <add>, %48, %cst_16 [1] : vector<8x8xf32> to vector<8xf32>
    %50 = vector.shape_cast %49 : vector<8xf32> to vector<8x1xf32>
    %51 = tpu.reciprocal %50 {approx = true} : vector<8x1xf32> -> vector<8x1xf32>
    %52 = vector.broadcast %51 : vector<8x1xf32> to vector<8x8xf32>
    %53 = arith.mulf %48, %52 : vector<8x8xf32>
    %54 = arith.truncf %53 : vector<8x8xf32> to vector<8x8xbf16>
    %cst_17 = arith.constant dense<0.000000e+00> : vector<8x32xf32>
    %55 = tpu.matmul %54, %41, %cst_17 {dimension_numbers = #tpu.dot_dimension_numbers<[1], [0], [0], [1], [0, 0, 1, 1], [], []>} : vector<8x8xbf16>, vector<8x32xbf16>, vector<8x32xf32> -> vector<8x32xf32>
    %56 = arith.truncf %55 : vector<8x32xf32> to vector<8x32xbf16>
    %c32 = arith.constant 32 : index
    %c0_18 = arith.constant 0 : index
    %57 = vector.load %arg3[%c32, %c0_18] : memref<128x128xbf16, #tpu.memory_space<vmem>>, vector<32x128xbf16>
    %cst_19 = arith.constant dense<0.000000e+00> : vector<8x128xf32>
    %58 = tpu.matmul %56, %57, %cst_19 {dimension_numbers = #tpu.dot_dimension_numbers<[1], [0], [0], [1], [0, 0, 1, 1], [], []>} : vector<8x32xbf16>, vector<32x128xbf16>, vector<8x128xf32> -> vector<8x128xf32>
    %59 = arith.addf %35, %58 : vector<8x128xf32>
    %60 = vector.extract_strided_slice %4 {offsets = [0, 64], sizes = [8, 32], strides = [1, 1]} : vector<8x384xf32> to vector<8x32xf32>
    %61 = arith.truncf %60 : vector<8x32xf32> to vector<8x32xbf16>
    %62 = vector.extract_strided_slice %4 {offsets = [0, 192], sizes = [8, 32], strides = [1, 1]} : vector<8x384xf32> to vector<8x32xf32>
    %63 = arith.truncf %62 : vector<8x32xf32> to vector<8x32xbf16>
    %64 = vector.extract_strided_slice %4 {offsets = [0, 320], sizes = [8, 32], strides = [1, 1]} : vector<8x384xf32> to vector<8x32xf32>
    %65 = arith.truncf %64 : vector<8x32xf32> to vector<8x32xbf16>
    %cst_20 = arith.constant dense<0.000000e+00> : vector<8x8xf32>
    %66 = tpu.matmul %61, %63, %cst_20 {dimension_numbers = #tpu.dot_dimension_numbers<[1], [1], [0], [0], [0, 0, 1, 0], [], []>} : vector<8x32xbf16>, vector<8x32xbf16>, vector<8x8xf32> -> vector<8x8xf32>
    %67 = arith.addf %66, %10 : vector<8x8xf32>
    %cst_21 = arith.constant dense<0xFF800000> : vector<8xf32>
    %68 = vector.multi_reduction <maximumf>, %67, %cst_21 [1] : vector<8x8xf32> to vector<8xf32>
    %69 = vector.shape_cast %68 : vector<8xf32> to vector<8x1xf32>
    %70 = vector.broadcast %69 : vector<8x1xf32> to vector<8x8xf32>
    %71 = arith.subf %67, %70 : vector<8x8xf32>
    %72 = math.exp %71 : vector<8x8xf32>
    %cst_22 = arith.constant dense<0.000000e+00> : vector<8xf32>
    %73 = vector.multi_reduction <add>, %72, %cst_22 [1] : vector<8x8xf32> to vector<8xf32>
    %74 = vector.shape_cast %73 : vector<8xf32> to vector<8x1xf32>
    %75 = tpu.reciprocal %74 {approx = true} : vector<8x1xf32> -> vector<8x1xf32>
    %76 = vector.broadcast %75 : vector<8x1xf32> to vector<8x8xf32>
    %77 = arith.mulf %72, %76 : vector<8x8xf32>
    %78 = arith.truncf %77 : vector<8x8xf32> to vector<8x8xbf16>
    %cst_23 = arith.constant dense<0.000000e+00> : vector<8x32xf32>
    %79 = tpu.matmul %78, %65, %cst_23 {dimension_numbers = #tpu.dot_dimension_numbers<[1], [0], [0], [1], [0, 0, 1, 1], [], []>} : vector<8x8xbf16>, vector<8x32xbf16>, vector<8x32xf32> -> vector<8x32xf32>
    %80 = arith.truncf %79 : vector<8x32xf32> to vector<8x32xbf16>
    %c64 = arith.constant 64 : index
    %c0_24 = arith.constant 0 : index
    %81 = vector.load %arg3[%c64, %c0_24] : memref<128x128xbf16, #tpu.memory_space<vmem>>, vector<32x128xbf16>
    %cst_25 = arith.constant dense<0.000000e+00> : vector<8x128xf32>
    %82 = tpu.matmul %80, %81, %cst_25 {dimension_numbers = #tpu.dot_dimension_numbers<[1], [0], [0], [1], [0, 0, 1, 1], [], []>} : vector<8x32xbf16>, vector<32x128xbf16>, vector<8x128xf32> -> vector<8x128xf32>
    %83 = arith.addf %59, %82 : vector<8x128xf32>
    %84 = vector.extract_strided_slice %4 {offsets = [0, 96], sizes = [8, 32], strides = [1, 1]} : vector<8x384xf32> to vector<8x32xf32>
    %85 = arith.truncf %84 : vector<8x32xf32> to vector<8x32xbf16>
    %86 = vector.extract_strided_slice %4 {offsets = [0, 224], sizes = [8, 32], strides = [1, 1]} : vector<8x384xf32> to vector<8x32xf32>
    %87 = arith.truncf %86 : vector<8x32xf32> to vector<8x32xbf16>
    %88 = vector.extract_strided_slice %4 {offsets = [0, 352], sizes = [8, 32], strides = [1, 1]} : vector<8x384xf32> to vector<8x32xf32>
    %89 = arith.truncf %88 : vector<8x32xf32> to vector<8x32xbf16>
    %cst_26 = arith.constant dense<0.000000e+00> : vector<8x8xf32>
    %90 = tpu.matmul %85, %87, %cst_26 {dimension_numbers = #tpu.dot_dimension_numbers<[1], [1], [0], [0], [0, 0, 1, 0], [], []>} : vector<8x32xbf16>, vector<8x32xbf16>, vector<8x8xf32> -> vector<8x8xf32>
    %91 = arith.addf %90, %10 : vector<8x8xf32>
    %cst_27 = arith.constant dense<0xFF800000> : vector<8xf32>
    %92 = vector.multi_reduction <maximumf>, %91, %cst_27 [1] : vector<8x8xf32> to vector<8xf32>
    %93 = vector.shape_cast %92 : vector<8xf32> to vector<8x1xf32>
    %94 = vector.broadcast %93 : vector<8x1xf32> to vector<8x8xf32>
    %95 = arith.subf %91, %94 : vector<8x8xf32>
    %96 = math.exp %95 : vector<8x8xf32>
    %cst_28 = arith.constant dense<0.000000e+00> : vector<8xf32>
    %97 = vector.multi_reduction <add>, %96, %cst_28 [1] : vector<8x8xf32> to vector<8xf32>
    %98 = vector.shape_cast %97 : vector<8xf32> to vector<8x1xf32>
    %99 = tpu.reciprocal %98 {approx = true} : vector<8x1xf32> -> vector<8x1xf32>
    %100 = vector.broadcast %99 : vector<8x1xf32> to vector<8x8xf32>
    %101 = arith.mulf %96, %100 : vector<8x8xf32>
    %102 = arith.truncf %101 : vector<8x8xf32> to vector<8x8xbf16>
    %cst_29 = arith.constant dense<0.000000e+00> : vector<8x32xf32>
    %103 = tpu.matmul %102, %89, %cst_29 {dimension_numbers = #tpu.dot_dimension_numbers<[1], [0], [0], [1], [0, 0, 1, 1], [], []>} : vector<8x8xbf16>, vector<8x32xbf16>, vector<8x32xf32> -> vector<8x32xf32>
    %104 = arith.truncf %103 : vector<8x32xf32> to vector<8x32xbf16>
    %c96 = arith.constant 96 : index
    %c0_30 = arith.constant 0 : index
    %105 = vector.load %arg3[%c96, %c0_30] : memref<128x128xbf16, #tpu.memory_space<vmem>>, vector<32x128xbf16>
    %cst_31 = arith.constant dense<0.000000e+00> : vector<8x128xf32>
    %106 = tpu.matmul %104, %105, %cst_31 {dimension_numbers = #tpu.dot_dimension_numbers<[1], [0], [0], [1], [0, 0, 1, 1], [], []>} : vector<8x32xbf16>, vector<32x128xbf16>, vector<8x128xf32> -> vector<8x128xf32>
    %107 = arith.addf %83, %106 : vector<8x128xf32>
    %c0_32 = arith.constant 0 : index
    %c0_33 = arith.constant 0 : index
    %c0_34 = arith.constant 0 : index
    %108 = vector.load %arg4[%c0_32, %c0_33, %c0_34] : memref<1x8x128xf32, #tpu.memory_space<vmem>>, vector<1x8x128xf32>
    %109 = vector.shape_cast %108 : vector<1x8x128xf32> to vector<8x128xf32>
    %110 = vector.shape_cast %107 : vector<8x128xf32> to vector<1x8x128xf32>
    tpu.vector_store %arg4[%c0_32, %c0_33, %c0_34], %110 {strides = array<i32>} : memref<1x8x128xf32, #tpu.memory_space<vmem>>, vector<1x8x128xf32>,
    return
  }
  func.func @transform_0(%arg0: i32) -> (i32, i32, i32) {
    %c0_i32 = arith.constant 0 : i32
    %c0_i32_0 = arith.constant 0 : i32
    %c0_i32_1 = arith.constant 0 : i32
    return %arg0, %c0_i32, %c0_i32_0 : i32, i32, i32
  }
  func.func @transform_1(%arg0: i32) -> (i32, i32) {
    %c0_i32 = arith.constant 0 : i32
    %c0_i32_0 = arith.constant 0 : i32
    %c0_i32_1 = arith.constant 0 : i32
    return %c0_i32, %c0_i32_0 : i32, i32
  }
  func.func @transform_2(%arg0: i32) -> (i32, i32) {
    %c0_i32 = arith.constant 0 : i32
    %c0_i32_0 = arith.constant 0 : i32
    %c0_i32_1 = arith.constant 0 : i32
    return %c0_i32, %c0_i32_0 : i32, i32
  }
  func.func @transform_3(%arg0: i32) -> (i32, i32, i32) {
    %c0_i32 = arith.constant 0 : i32
    %c0_i32_0 = arith.constant 0 : i32
    %c0_i32_1 = arith.constant 0 : i32
    return %arg0, %c0_i32, %c0_i32_0 : i32, i32, i32
  }
}

</mosaic_0001>

<llo_original>
// kernel: tpu_custom_call.1
$region0: #{tpu_custom_call.1}
  #allocation0 [shape = 'u32[]', space=smem, size = 0x4, offset = 0x4, fixed_abs, tag = 'smem constant byte address 0x4 - core index']
  #allocation1 [shape = 'u32[72,128]{1,0:T(1,128)}', space=vmem, size = 0x9000, scoped, tag = 'internal scratch']
  %s0 = inlined_call_operand.hbm [shape: f32[2,8,128], index: 0, kind: input, shape index: {}]
  %s1 = inlined_call_operand.hbm [shape: bf16[128,384], index: 1, kind: input, shape index: {}]
  %s2 = inlined_call_operand.hbm [shape: bf16[128,128], index: 2, kind: input, shape index: {}]
  %s3 = inlined_call_operand.hbm [shape: f32[2,8,128], index: 3, kind: output, shape index: {}]
  %s4 = sld [smem:[#allocation0]]
  $region57: #{tpu_custom_call.1} parent=0
    _
  %s6 = ssub.s32 1, %s4
  %s7 = scalar_select 0, %s6, %s4
  $region1: #{tpu_custom_call.1} parent=0
    #allocation2 [shape = 'u8[8192]{0}', space=vmem, size = 0x2000, scoped, tag = 'input window, operand 0']
    #allocation3 [shape = 's32[2]{0}', space=sflag, size = 0x8, scoped, tag = 'scoped memory for tpu_custom_call.1']
    #allocation4 [shape = 's32[2]{0}', space=sflag, size = 0x8, scoped, tag = 'scoped memory for tpu_custom_call.1']
    #allocation5 [shape = 'u8[98304]{0}', space=vmem, size = 0x18000, scoped, tag = 'input window, operand 1, single buffered']
    #allocation6 [shape = 's32[1]{0}', space=sflag, size = 0x4, scoped, tag = 'scoped memory for tpu_custom_call.1']
    #allocation7 [shape = 'u8[32768]{0}', space=vmem, size = 0x8000, scoped, tag = 'input window, operand 2, single buffered']
    #allocation8 [shape = 'u8[8192]{0}', space=vmem, size = 0x2000, scoped, tag = 'output window, operand 0']
    %8 = vsyncpa [#allocation3], 0
    %s9 = scalar_lea.sflag [#allocation3], 1
    %10 = vsyncpa %s9, 0
    %11 = vsyncpa [#allocation6], 0
    %12 = vsyncpa [#allocation4], 0
    %s13 = scalar_lea.sflag [#allocation4], 1
    %14 = vsyncpa %s13, 0
    loop: start=0, step=1, limit=4
    $region2: #{tpu_custom_call.1} parent=1 // loop_pre_header
      _
    $region3: #{tpu_custom_call.1} parent=1 // loop_header
      %s16 = sphi 0, %s20
      %p17 = scmp.ge.s32.totalorder %s16, 4
      %s26 = sphi 0, %s28
      %s29 = sphi 0, %s26
      %s30 = sphi 0, %s29
      %s46 = sphi 0, %s30
      %s50 = sphi 0, %s50
      %s52 = sphi 0, %s50
      %s53 = sphi 0, %s52
      %s67 = sphi 0, %s53
      %s71 = sphi 0, %s71
      %s73 = sphi 0, %s71
      %s74 = sphi 0, %s73
      %s88 = sphi 0, %s74
      %s94 = sphi 0, %s96
      %s97 = sphi 0, %s94
      %s98 = sphi 0, %s97
      %s114 = sphi 0, %s98
    $region4: #{tpu_custom_call.1} parent=1 // loop_header_branch
      %19 = sbr.rel (%p17) target = $region8
    $region5: #{tpu_custom_call.1} parent=1 // loop_body
      %s21 = ssub.s32 %s16, 1
      %s22 = ssub.s32 %s16, 2
      %s23 = sadd.s32 %s16, 1
      %s24 = ssub.s32 %s16, %s23
      %p25 = scmp.eq.s32.totalorder %s24, 0
      %s27 = sadd.s32 %s26, 1
      %s28 = scalar_select %p25, %s26, %s27
      %p31 = pneg %p25
      %p32 = scmp.eq.s32.totalorder %s16, 1
      %p33 = por %p31, %p32
      %p34 = scmp.ne.s32.totalorder %s26, %s29
      %p35 = scmp.eq.s32.totalorder %s16, 0
      %p36 = por %p34, %p35
      %p37 = scmp.ne.s32.totalorder %s26, %s29
      %p38 = scmp.eq.s32.totalorder %s21, 1
      %p39 = por %p37, %p38
      %p40 = scmp.ne.s32.totalorder %s29, %s30
      %p41 = scmp.eq.s32.totalorder %s21, 0
      %p42 = por %p40, %p41
      %p43 = scmp.ne.s32.totalorder %s29, %s30
      %p44 = scmp.eq.s32.totalorder %s22, 1
      %p45 = por %p43, %p44
      %p47 = scmp.ne.s32.totalorder %s30, %s46
      %p48 = scmp.eq.s32.totalorder %s22, 0
      %p49 = por %p47, %p48
      %s51 = sadd.s32 %s50, 1
      %p54 = scmp.eq.s32.totalorder %s16, 1
      %p55 = scmp.ne.s32.totalorder %s50, %s52
      %p56 = scmp.eq.s32.totalorder %s16, 0
      %p57 = por %p55, %p56
      %p58 = scmp.ne.s32.totalorder %s50, %s52
      %p59 = scmp.eq.s32.totalorder %s21, 1
      %p60 = por %p58, %p59
      %p61 = scmp.ne.s32.totalorder %s52, %s53
      %p62 = scmp.eq.s32.totalorder %s21, 0
      %p63 = por %p61, %p62
      %p64 = scmp.ne.s32.totalorder %s52, %s53
      %p65 = scmp.eq.s32.totalorder %s22, 1
      %p66 = por %p64, %p65
      %p68 = scmp.ne.s32.totalorder %s53, %s67
      %p69 = scmp.eq.s32.totalorder %s22, 0
      %p70 = por %p68, %p69
      %s72 = sadd.s32 %s71, 1
      %p75 = scmp.eq.s32.totalorder %s16, 1
      %p76 = scmp.ne.s32.totalorder %s71, %s73
      %p77 = scmp.eq.s32.totalorder %s16, 0
      %p78 = por %p76, %p77
      %p79 = scmp.ne.s32.totalorder %s71, %s73
      %p80 = scmp.eq.s32.totalorder %s21, 1
      %p81 = por %p79, %p80
      %p82 = scmp.ne.s32.totalorder %s73, %s74
      %p83 = scmp.eq.s32.totalorder %s21, 0
      %p84 = por %p82, %p83
      %p85 = scmp.ne.s32.totalorder %s73, %s74
      %p86 = scmp.eq.s32.totalorder %s22, 1
      %p87 = por %p85, %p86
      %p89 = scmp.ne.s32.totalorder %s74, %s88
      %p90 = scmp.eq.s32.totalorder %s22, 0
      %p91 = por %p89, %p90
      %s92 = ssub.s32 %s16, %s23
      %p93 = scmp.eq.s32.totalorder %s92, 0
      %s95 = sadd.s32 %s94, 1
      %s96 = scalar_select %p93, %s94, %s95
      %p99 = pneg %p93
      %p100 = scmp.eq.s32.totalorder %s16, 1
      %p101 = por %p99, %p100
      %p102 = scmp.ne.s32.totalorder %s94, %s97
      %p103 = scmp.eq.s32.totalorder %s16, 0
      %p104 = por %p102, %p103
      %p105 = scmp.ne.s32.totalorder %s94, %s97
      %p106 = scmp.eq.s32.totalorder %s21, 1
      %p107 = por %p105, %p106
      %p108 = scmp.ne.s32.totalorder %s97, %s98
      %p109 = scmp.eq.s32.totalorder %s21, 0
      %p110 = por %p108, %p109
      %p111 = scmp.ne.s32.totalorder %s97, %s98
      %p112 = scmp.eq.s32.totalorder %s22, 1
      %p113 = por %p111, %p112
      %p115 = scmp.ne.s32.totalorder %s98, %s114
      %p116 = scmp.eq.s32.totalorder %s22, 0
      %p117 = por %p115, %p116
      %p118 = scmp.le.s32.totalorder 1, %s16
      %p119 = scmp.lt.s32.totalorder %s16, 3
      %p120 = pnand %p118, %p119
      %p121 = pneg %p120
      // Predicated region
      $region9: #{tpu_custom_call.1} parent=5 // pred_check
        _
      $region10: #{tpu_custom_call.1} parent=5 // pred_check_branch
        %123 = sbr.rel (%p120) target = $region12
      $region11: #{tpu_custom_call.1} parent=5 // pred_region
        %s124 = ssub.s32 %s16, 1
        // Predicated region
        $region13: #{tpu_custom_call.1} parent=11 // pred_check
          %p125 = pneg %p63
        $region14: #{tpu_custom_call.1} parent=11 // pred_check_branch
          %127 = sbr.rel (%p125) target = $region16
        $region15: #{tpu_custom_call.1} parent=11 // pred_region
          %129 = vsyncadd [#allocation6], 0
          %s130 = sshll.u32 %s1, 4
          %s131 = int_to_ptr.hbm [resolvable:$true] %s130
          %s132 = sshll.u32 [#allocation5], 4
          %s133 = int_to_ptr.vmem [resolvable:$true] %s132
          %138 = dma.hbm_to_vmem [thread:$0]  %s131, 3072, %s133, [#allocation6], 192, 192, 12
        $region16: #{tpu_custom_call.1} parent=11 // pred_fallthru
          _
        // Predicated region
        $region17: #{tpu_custom_call.1} parent=11 // pred_check
          %p139 = pneg %p84
        $region18: #{tpu_custom_call.1} parent=11 // pred_check_branch
          %141 = sbr.rel (%p139) target = $region20
        $region19: #{tpu_custom_call.1} parent=11 // pred_region
          %143 = vsyncadd [#allocation6], 0
          %s144 = sshll.u32 %s2, 4
          %s145 = int_to_ptr.hbm [resolvable:$true] %s144
          %s146 = sshll.u32 [#allocation7], 4
          %s147 = int_to_ptr.vmem [resolvable:$true] %s146
          %152 = dma.hbm_to_vmem [thread:$0]  %s145, 1024, %s147, [#allocation6], 64, 64, 4
        $region20: #{tpu_custom_call.1} parent=11 // pred_fallthru
          _
      $region12: #{tpu_custom_call.1} parent=5 // pred_fallthru
        _
      %p153 = scmp.lt.s32.totalorder %s16, 2
      // Predicated region
      $region21: #{tpu_custom_call.1} parent=5 // pred_check
        %p154 = pneg %p153
      $region22: #{tpu_custom_call.1} parent=5 // pred_check_branch
        %156 = sbr.rel (%p154) target = $region24
      $region23: #{tpu_custom_call.1} parent=5 // pred_region
        // Predicated region
        $region25: #{tpu_custom_call.1} parent=23 // pred_check
          %p157 = pneg %p36
        $region26: #{tpu_custom_call.1} parent=23 // pred_check_branch
          %159 = sbr.rel (%p157) target = $region28
        $region27: #{tpu_custom_call.1} parent=23 // pred_region
          %s160 = sand.u32 %s26, 1
          %s161 = scalar_lea.sflag [#allocation3], %s160
          %s162 = sand.u32 %s26, 1
          %s163 = smul.addr %s162, 8
          %s164 = scalar_lea.vmem [#allocation2], %s163
          %166 = vsyncadd %s161, 0
          %s167 = smul.addr %s16, 8
          %s168 = scalar_lea.hbm %s0, %s167
          %s170 = sshll.u32 %s168, 4
          %s171 = int_to_ptr.hbm [resolvable:$true] %s170
          %s172 = sshll.u32 %s164, 4
          %s173 = int_to_ptr.vmem [resolvable:$true] %s172
          %175 = dma.hbm_to_vmem [thread:$0]  %s171, 128, %s173, %s161
        $region28: #{tpu_custom_call.1} parent=23 // pred_fallthru
          _
      $region24: #{tpu_custom_call.1} parent=5 // pred_fallthru
        _
      %p176 = scmp.le.s32.totalorder 1, %s16
      %p177 = scmp.lt.s32.totalorder %s16, 3
      %p178 = pnand %p176, %p177
      %p179 = pneg %p178
      // Predicated region
      $region29: #{tpu_custom_call.1} parent=5 // pred_check
        _
      $region30: #{tpu_custom_call.1} parent=5 // pred_check_branch
        %181 = sbr.rel (%p178) target = $region32
      $region31: #{tpu_custom_call.1} parent=5 // pred_region
        %s182 = ssub.s32 %s16, 1
        %s183 = sand.u32 %s29, 1
        %s184 = scalar_lea.sflag [#allocation3], %s183
        %s185 = sand.u32 %s29, 1
        %s186 = smul.addr %s185, 8
        %s187 = scalar_lea.vmem [#allocation2], %s186
        // Predicated region
        $region33: #{tpu_custom_call.1} parent=31 // pred_check
          %p188 = pneg %p42
        $region34: #{tpu_custom_call.1} parent=31 // pred_check_branch
          %190 = sbr.rel (%p188) target = $region36
        $region35: #{tpu_custom_call.1} parent=31 // pred_region
          %192 = dma.done %s184, 128
        $region36: #{tpu_custom_call.1} parent=31 // pred_fallthru
          _
        // Predicated region
        $region37: #{tpu_custom_call.1} parent=31 // pred_check
          %p193 = pneg %p63
        $region38: #{tpu_custom_call.1} parent=31 // pred_check_branch
          %195 = sbr.rel (%p193) target = $region40
        $region39: #{tpu_custom_call.1} parent=31 // pred_region
          %197 = dma.done [#allocation6], 3072
        $region40: #{tpu_custom_call.1} parent=31 // pred_fallthru
          _
        // Predicated region
        $region41: #{tpu_custom_call.1} parent=31 // pred_check
          %p198 = pneg %p84
        $region42: #{tpu_custom_call.1} parent=31 // pred_check_branch
          %200 = sbr.rel (%p198) target = $region44
        $region43: #{tpu_custom_call.1} parent=31 // pred_region
          %202 = dma.done [#allocation6], 1024
        $region44: #{tpu_custom_call.1} parent=31 // pred_fallthru
          _
        %s203 = sand.u32 %s29, 1
        %s204 = scalar_lea.sflag [#allocation3], %s203
        %s205 = sand.u32 %s29, 1
        %s206 = smul.addr %s205, 8
        %s207 = scalar_lea.vmem [#allocation2], %s206
        %p208 = pneg %p42
        %p209 = pneg %p39
        %p210 = pneg %p63
        %p211 = pneg %p60
        %p212 = pneg %p84
        %p213 = pneg %p81
        %p214 = pneg %p110
        %p215 = pneg %p107
        %s216 = sand.u32 %s97, 1
        %s217 = scalar_lea.sflag [#allocation4], %s216
        %s218 = sand.u32 %s97, 1
        %s219 = smul.addr %s218, 8
        %s220 = scalar_lea.vmem [#allocation8], %s219
        %v222 = vld [vmem:[%s187] sm:$0xff]
        %v223 = vpack.c.bf16 %v222, %v222
        %v224 = vld [vmem:[#allocation5] sm:$0xff]
        %v225 = vld [vmem:[#allocation5 + $0x8] sm:$0xf]
        %v226 = vld [vmem:[#allocation5 + $0xc] sm:$0xff]
        %v227 = vld [vmem:[#allocation5 + $0x14] sm:$0xf]
        %v228 = vld [vmem:[#allocation5 + $0x18] sm:$0xff]
        %v229 = vld [vmem:[#allocation5 + $0x20] sm:$0xf]
        %v230 = vld [vmem:[#allocation5 + $0x24] sm:$0xff]
        %v231 = vld [vmem:[#allocation5 + $0x2c] sm:$0xf]
        %v232 = vld [vmem:[#allocation5 + $0x30] sm:$0xff]
        %v233 = vld [vmem:[#allocation5 + $0x38] sm:$0xf]
        %v234 = vld [vmem:[#allocation5 + $0x3c] sm:$0xff]
        %v235 = vld [vmem:[#allocation5 + $0x44] sm:$0xf]
        %v236 = vld [vmem:[#allocation5 + $0x48] sm:$0xff]
        %v237 = vld [vmem:[#allocation5 + $0x50] sm:$0xf]
        %v238 = vld [vmem:[#allocation5 + $0x54] sm:$0xff]
        %v239 = vld [vmem:[#allocation5 + $0x5c] sm:$0xf]
        %v240 = vld [vmem:[#allocation5 + $0x60] sm:$0xff]
        %v241 = vld [vmem:[#allocation5 + $0x68] sm:$0xf]
        %v242 = vld [vmem:[#allocation5 + $0x6c] sm:$0xff]
        %v243 = vld [vmem:[#allocation5 + $0x74] sm:$0xf]
        %v244 = vld [vmem:[#allocation5 + $0x78] sm:$0xff]
        %v245 = vld [vmem:[#allocation5 + $0x80] sm:$0xf]
        %v246 = vld [vmem:[#allocation5 + $0x84] sm:$0xff]
        %v247 = vld [vmem:[#allocation5 + $0x8c] sm:$0xf]
        %v248 = vld [vmem:[#allocation5 + $0x90] sm:$0xff]
        %v249 = vld [vmem:[#allocation5 + $0x98] sm:$0xf]
        %v250 = vld [vmem:[#allocation5 + $0x9c] sm:$0xff]
        %v251 = vld [vmem:[#allocation5 + $0xa4] sm:$0xf]
        %v252 = vld [vmem:[#allocation5 + $0xa8] sm:$0xff]
        %v253 = vld [vmem:[#allocation5 + $0xb0] sm:$0xf]
        %v254 = vld [vmem:[#allocation5 + $0xb4] sm:$0xff]
        %v255 = vld [vmem:[#allocation5 + $0xbc] sm:$0xf]
        %v288 = vunpack.c.l.b16 %v224
        %v289 = vunpack.c.h.b16 %v224
        %v290 = vunpack.c.l.b16 %v225
        %v291 = vunpack.c.l.b16 %v226
        %v292 = vunpack.c.h.b16 %v226
        %v293 = vunpack.c.l.b16 %v227
        %v294 = vunpack.c.l.b16 %v228
        %v295 = vunpack.c.h.b16 %v228
        %v296 = vunpack.c.l.b16 %v229
        %v297 = vunpack.c.l.b16 %v230
        %v298 = vunpack.c.h.b16 %v230
        %v299 = vunpack.c.l.b16 %v231
        %v300 = vunpack.c.l.b16 %v232
        %v301 = vunpack.c.h.b16 %v232
        %v302 = vunpack.c.l.b16 %v233
        %v303 = vunpack.c.l.b16 %v234
        %v304 = vunpack.c.h.b16 %v234
        %v305 = vunpack.c.l.b16 %v235
        %v306 = vunpack.c.l.b16 %v236
        %v307 = vunpack.c.h.b16 %v236
        %v308 = vunpack.c.l.b16 %v237
        %v309 = vunpack.c.l.b16 %v238
        %v310 = vunpack.c.h.b16 %v238
        %v311 = vunpack.c.l.b16 %v239
        %v312 = vunpack.c.l.b16 %v240
        %v313 = vunpack.c.h.b16 %v240
        %v314 = vunpack.c.l.b16 %v241
        %v315 = vunpack.c.l.b16 %v242
        %v316 = vunpack.c.h.b16 %v242
        %v317 = vunpack.c.l.b16 %v243
        %v318 = vunpack.c.l.b16 %v244
        %v319 = vunpack.c.h.b16 %v244
        %v320 = vunpack.c.l.b16 %v245
        %v321 = vunpack.c.l.b16 %v246
        %v322 = vunpack.c.h.b16 %v246
        %v323 = vunpack.c.l.b16 %v247
        %v324 = vunpack.c.l.b16 %v248
        %v325 = vunpack.c.h.b16 %v248
        %v326 = vunpack.c.l.b16 %v249
        %v327 = vunpack.c.l.b16 %v250
        %v328 = vunpack.c.h.b16 %v250
        %v329 = vunpack.c.l.b16 %v251
        %v330 = vunpack.c.l.b16 %v252
        %v331 = vunpack.c.h.b16 %v252
        %v332 = vunpack.c.l.b16 %v253
        %v333 = vunpack.c.l.b16 %v254
        %v334 = vunpack.c.h.b16 %v254
        %v335 = vunpack.c.l.b16 %v255
        %v336 = vpack.c.b16 %v291, %v288
        %v337 = vpack.c.b16 %v292, %v289
        %v338 = vpack.c.b16 %v293, %v290
        %v339 = vpack.c.b16 %v297, %v294
        %v340 = vpack.c.b16 %v298, %v295
        %v341 = vpack.c.b16 %v299, %v296
        %v342 = vpack.c.b16 %v303, %v300
        %v343 = vpack.c.b16 %v304, %v301
        %v344 = vpack.c.b16 %v305, %v302
        %v345 = vpack.c.b16 %v309, %v306
        %v346 = vpack.c.b16 %v310, %v307
        %v347 = vpack.c.b16 %v311, %v308
        %v348 = vpack.c.b16 %v315, %v312
        %v349 = vpack.c.b16 %v316, %v313
        %v350 = vpack.c.b16 %v317, %v314
        %v351 = vpack.c.b16 %v321, %v318
        %v352 = vpack.c.b16 %v322, %v319
        %v353 = vpack.c.b16 %v323, %v320
        %v354 = vpack.c.b16 %v327, %v324
        %v355 = vpack.c.b16 %v328, %v325
        %v356 = vpack.c.b16 %v329, %v326
        %v357 = vpack.c.b16 %v333, %v330
        %v358 = vpack.c.b16 %v334, %v331
        %v359 = vpack.c.b16 %v335, %v332
        %384 = vmatpush.bf16.msra.mxu0 %v357
        %385 = vmatpush.bf16.msra.mxu0 %v354
        %386 = vmatpush.bf16.msra.mxu0 %v351
        %387 = vmatpush.bf16.msra.mxu0 %v348
        %388 = vmatpush.bf16.msra.mxu0 %v345
        %389 = vmatpush.bf16.msra.mxu0 %v342
        %390 = vmatpush.bf16.msra.mxu0 %v339
        %391 = vmatpush.bf16.msra.mxu0 %v336
        %392 = vmatmul.bf16.gmra.mxu0 %v223
        %v393 = vpop.f32.mrf.mxu0
        %v394 = vadd.f32 0.0, %v393
        %v395 = vpop.f32.mrf.mxu0
        %396 = vdwg.mxu0
        %397 = vmatpush.bf16.msra.mxu0 %v358
        %398 = vmatpush.bf16.msra.mxu0 %v355
        %399 = vmatpush.bf16.msra.mxu0 %v352
        %400 = vmatpush.bf16.msra.mxu0 %v349
        %401 = vmatpush.bf16.msra.mxu0 %v346
        %402 = vmatpush.bf16.msra.mxu0 %v343
        %403 = vmatpush.bf16.msra.mxu0 %v340
        %404 = vmatpush.bf16.msra.mxu0 %v337
        %405 = vmatmul.bf16.gmra.mxu0 %v223
        %v406 = vpop.f32.mrf.mxu0
        %v407 = vadd.f32 0.0, %v406
        %v408 = vpop.f32.mrf.mxu0
        %409 = vdwg.mxu0
        %410 = vmatpush.bf16.msra.mxu0 %v359
        %411 = vmatpush.bf16.msra.mxu0 %v356
        %412 = vmatpush.bf16.msra.mxu0 %v353
        %413 = vmatpush.bf16.msra.mxu0 %v350
        %414 = vmatpush.bf16.msra.mxu0 %v347
        %415 = vmatpush.bf16.msra.mxu0 %v344
        %416 = vmatpush.bf16.msra.mxu0 %v341
        %417 = vmatpush.bf16.msra.mxu0 %v338
        %418 = vmatmul.bf16.gmra.mxu0 %v223
        %v419 = vpop.f32.mrf.mxu0
        %v420 = vadd.f32 0.0, %v419
        %v421 = vpop.f32.mrf.mxu0
        %422 = vdwg.mxu0
        %v423 = vlaneseq
        %v424 = vshrl.u32 %v423, 7
        %v425 = vlaneseq
        %v426 = vand.u32 %v425, 127
        %vm427 = vcmp.le.s32.totalorder %v426, %v424
        %v428 = vsel %vm427, 0.0, -1e+09
        %v429 = vpack.c.bf16 %v394, %v394
        %v430 = vpack.c.bf16 %v407, %v407
        %v431 = vpack.c.bf16 %v420, %v420
        %vm432 = vcmask 261120
        %v434 = vsel %vm432, %v429, 0
        %v437 = vsel %vm432, %v430, 0
        %439 = vmatpush.bf16.xpose.msra.mxu0 0
        %440 = vmatpush.bf16.xpose.msra.mxu0 0
        %441 = vmatpush.bf16.xpose.msra.mxu0 0
        %442 = vmatpush.bf16.xpose.msra.mxu0 0
        %443 = vmatpush.bf16.xpose.msra.mxu0 0
        %444 = vmatpush.bf16.xpose.msra.mxu0 0
        %445 = vmatpush.bf16.xpose.msra.mxu0 0
        %446 = vmatpush.bf16.xpose.msra.mxu0 %v437
        %447 = vmatmul.bf16.gmra.mxu0 %v434
        %v448 = vpop.f32.mrf.mxu0
        %v449 = vadd.f32 %v428, %v448
        %v450 = vpop.f32.mrf.mxu0
        %451 = vdwg.mxu0
        %vm452 = vcmask 64512
        %v453 = vsel %vm452, %v449, -inf
        %454 = vmax.xlane.f32.xlu0 %v453
        %v455 = vpop.xlane.xlu0 %454
        %v456 = vsub.f32 %v449, %v455
        %v457 = vmul.f32 %v456, 1.442695
        %v458 = vpow.pop %v457
        %v459 = vsel %vm452, %v458, 0.0
        %460 = vadd.xlane.f32.xlu0 %v459
        %v461 = vpop.xlane.xlu0 %460
        %v462 = vrcp.pop %v461
        %v463 = vmul.f32 %v458, %v462
        %v464 = vpack.c.bf16 %v463, %v463
        %v466 = vsel %vm452, %v464, 0
        %vm468 = vcmask 1043456
        %v470 = vsel %vm468, %v431, 0
        %472 = vmatpush.bf16.msra.mxu0 0
        %473 = vmatpush.bf16.msra.mxu0 0
        %474 = vmatpush.bf16.msra.mxu0 0
        %475 = vmatpush.bf16.msra.mxu0 0
        %476 = vmatpush.bf16.msra.mxu0 0
        %477 = vmatpush.bf16.msra.mxu0 0
        %478 = vmatpush.bf16.msra.mxu0 0
        %479 = vmatpush.bf16.msra.mxu0 %v470
        %480 = vmatmul.bf16.gmra.mxu0 %v466
        %v481 = vpop.f32.mrf.mxu0
        %v482 = vadd.f32 0.0, %v481
        %v483 = vpop.f32.mrf.mxu0
        %484 = vdwg.mxu0
        %v485 = vpack.c.bf16 %v482, %v482
        %v486 = vld [vmem:[#allocation7] sm:$0xf]
        %v487 = vld [vmem:[#allocation7 + $0x4] sm:$0xf]
        %v488 = vld [vmem:[#allocation7 + $0x8] sm:$0xf]
        %v489 = vld [vmem:[#allocation7 + $0xc] sm:$0xf]
        %491 = vrot.lane.b32.xlu0 %v429, 96
        %v492 = vpop.permute.xlu0 %491
        %494 = vrot.lane.b32.xlu0 %v430, 96
        %v495 = vpop.permute.xlu0 %494
        %v497 = vsel %vm432, %v492, 0
        %v500 = vsel %vm432, %v495, 0
        %502 = vmatpush.bf16.xpose.msra.mxu0 0
        %503 = vmatpush.bf16.xpose.msra.mxu0 0
        %504 = vmatpush.bf16.xpose.msra.mxu0 0
        %505 = vmatpush.bf16.xpose.msra.mxu0 0
        %506 = vmatpush.bf16.xpose.msra.mxu0 0
        %507 = vmatpush.bf16.xpose.msra.mxu0 0
        %508 = vmatpush.bf16.xpose.msra.mxu0 0
        %509 = vmatpush.bf16.xpose.msra.mxu0 %v500
        %510 = vmatmul.bf16.gmra.mxu0 %v497
        %v511 = vpop.f32.mrf.mxu0
        %v512 = vadd.f32 %v428, %v511
        %v513 = vpop.f32.mrf.mxu0
        %514 = vdwg.mxu0
        %v515 = vsel %vm452, %v512, -inf
        %516 = vmax.xlane.f32.xlu0 %v515
        %v517 = vpop.xlane.xlu0 %516
        %v518 = vsub.f32 %v512, %v517
        %v519 = vmul.f32 %v518, 1.442695
        %v520 = vpow.pop %v519
        %v521 = vsel %vm452, %v520, 0.0
        %522 = vadd.xlane.f32.xlu0 %v521
        %v523 = vpop.xlane.xlu0 %522
        %v524 = vrcp.pop %v523
        %v525 = vmul.f32 %v520, %v524
        %v526 = vpack.c.bf16 %v525, %v525
        %528 = vrot.lane.b32.xlu0 %v431, 96
        %v529 = vpop.permute.xlu0 %528
        %v531 = vsel %vm452, %v526, 0
        %v534 = vsel %vm468, %v529, 0
        %536 = vmatpush.bf16.msra.mxu0 0
        %537 = vmatpush.bf16.msra.mxu0 0
        %538 = vmatpush.bf16.msra.mxu0 0
        %539 = vmatpush.bf16.msra.mxu0 0
        %540 = vmatpush.bf16.msra.mxu0 0
        %541 = vmatpush.bf16.msra.mxu0 0
        %542 = vmatpush.bf16.msra.mxu0 0
        %543 = vmatpush.bf16.msra.mxu0 %v534
        %544 = vmatmul.bf16.gmra.mxu0 %v531
        %v545 = vpop.f32.mrf.mxu0
        %v546 = vadd.f32 0.0, %v545
        %v547 = vpop.f32.mrf.mxu0
        %548 = vdwg.mxu0
        %v549 = vpack.c.bf16 %v546, %v546
        %v550 = vld [vmem:[#allocation7 + $0x10] sm:$0xf]
        %v551 = vld [vmem:[#allocation7 + $0x14] sm:$0xf]
        %v552 = vld [vmem:[#allocation7 + $0x18] sm:$0xf]
        %v553 = vld [vmem:[#allocation7 + $0x1c] sm:$0xf]
        %v558 = vunpack.c.l.b16 %v550
        %v559 = vunpack.c.l.b16 %v551
        %v560 = vunpack.c.l.b16 %v552
        %v561 = vunpack.c.l.b16 %v553
        %v562 = vpack.c.b16 %v559, %v558
        %v563 = vpack.c.b16 %v561, %v560
        %v567 = vsel %vm432, %v549, 0
        %569 = vmatpush.bf16.msra.mxu0 0
        %570 = vmatpush.bf16.msra.mxu0 0
        %571 = vmatpush.bf16.msra.mxu0 0
        %572 = vmatpush.bf16.msra.mxu0 0
        %573 = vmatpush.bf16.msra.mxu0 0
        %574 = vmatpush.bf16.msra.mxu0 0
        %575 = vmatpush.bf16.msra.mxu0 %v563
        %576 = vmatpush.bf16.msra.mxu0 %v562
        %577 = vmatmul.bf16.gmra.mxu0 %v567
        %v578 = vpop.f32.mrf.mxu0
        %v579 = vadd.f32 0.0, %v578
        %v580 = vpop.f32.mrf.mxu0
        %581 = vdwg.mxu0
        %v586 = vunpack.c.l.b16 %v486
        %v587 = vunpack.c.l.b16 %v487
        %v588 = vunpack.c.l.b16 %v488
        %v589 = vunpack.c.l.b16 %v489
        %v590 = vpack.c.b16 %v587, %v586
        %v591 = vpack.c.b16 %v589, %v588
        %v595 = vsel %vm432, %v485, 0
        %597 = vmatpush.bf16.msra.mxu0 0
        %598 = vmatpush.bf16.msra.mxu0 0
        %599 = vmatpush.bf16.msra.mxu0 0
        %600 = vmatpush.bf16.msra.mxu0 0
        %601 = vmatpush.bf16.msra.mxu0 0
        %602 = vmatpush.bf16.msra.mxu0 0
        %603 = vmatpush.bf16.msra.mxu0 %v591
        %604 = vmatpush.bf16.msra.mxu0 %v590
        %605 = vmatmul.bf16.gmra.mxu0 %v595
        %v606 = vpop.f32.mrf.mxu0
        %v607 = vadd.f32 %v579, %v606
        %v608 = vpop.f32.mrf.mxu0
        %609 = vdwg.mxu0
        %610 = vrot.lane.b32.xlu0 %v429, 64
        %v611 = vpop.permute.xlu0 %610
        %612 = vrot.lane.b32.xlu0 %v430, 64
        %v613 = vpop.permute.xlu0 %612
        %v615 = vsel %vm432, %v611, 0
        %v618 = vsel %vm432, %v613, 0
        %620 = vmatpush.bf16.xpose.msra.mxu0 0
        %621 = vmatpush.bf16.xpose.msra.mxu0 0
        %622 = vmatpush.bf16.xpose.msra.mxu0 0
        %623 = vmatpush.bf16.xpose.msra.mxu0 0
        %624 = vmatpush.bf16.xpose.msra.mxu0 0
        %625 = vmatpush.bf16.xpose.msra.mxu0 0
        %626 = vmatpush.bf16.xpose.msra.mxu0 0
        %627 = vmatpush.bf16.xpose.msra.mxu0 %v618
        %628 = vmatmul.bf16.gmra.mxu0 %v615
        %v629 = vpop.f32.mrf.mxu0
        %v630 = vadd.f32 %v428, %v629
        %v631 = vpop.f32.mrf.mxu0
        %632 = vdwg.mxu0
        %v633 = vsel %vm452, %v630, -inf
        %634 = vmax.xlane.f32.xlu0 %v633
        %v635 = vpop.xlane.xlu0 %634
        %v636 = vsub.f32 %v630, %v635
        %v637 = vmul.f32 %v636, 1.442695
        %v638 = vpow.pop %v637
        %v639 = vsel %vm452, %v638, 0.0
        %640 = vadd.xlane.f32.xlu0 %v639
        %v641 = vpop.xlane.xlu0 %640
        %v642 = vrcp.pop %v641
        %v643 = vmul.f32 %v638, %v642
        %v644 = vpack.c.bf16 %v643, %v643
        %645 = vrot.lane.b32.xlu0 %v431, 64
        %v646 = vpop.permute.xlu0 %645
        %v648 = vsel %vm452, %v644, 0
        %v651 = vsel %vm468, %v646, 0
        %653 = vmatpush.bf16.msra.mxu0 0
        %654 = vmatpush.bf16.msra.mxu0 0
        %655 = vmatpush.bf16.msra.mxu0 0
        %656 = vmatpush.bf16.msra.mxu0 0
        %657 = vmatpush.bf16.msra.mxu0 0
        %658 = vmatpush.bf16.msra.mxu0 0
        %659 = vmatpush.bf16.msra.mxu0 0
        %660 = vmatpush.bf16.msra.mxu0 %v651
        %661 = vmatmul.bf16.gmra.mxu0 %v648
        %v662 = vpop.f32.mrf.mxu0
        %v663 = vadd.f32 0.0, %v662
        %v664 = vpop.f32.mrf.mxu0
        %665 = vdwg.mxu0
        %v666 = vpack.c.bf16 %v663, %v663
        %v667 = vld [vmem:[#allocation7 + $0x20] sm:$0xf]
        %v668 = vld [vmem:[#allocation7 + $0x24] sm:$0xf]
        %v669 = vld [vmem:[#allocation7 + $0x28] sm:$0xf]
        %v670 = vld [vmem:[#allocation7 + $0x2c] sm:$0xf]
        %v675 = vunpack.c.l.b16 %v667
        %v676 = vunpack.c.l.b16 %v668
        %v677 = vunpack.c.l.b16 %v669
        %v678 = vunpack.c.l.b16 %v670
        %v679 = vpack.c.b16 %v676, %v675
        %v680 = vpack.c.b16 %v678, %v677
        %v684 = vsel %vm432, %v666, 0
        %686 = vmatpush.bf16.msra.mxu0 0
        %687 = vmatpush.bf16.msra.mxu0 0
        %688 = vmatpush.bf16.msra.mxu0 0
        %689 = vmatpush.bf16.msra.mxu0 0
        %690 = vmatpush.bf16.msra.mxu0 0
        %691 = vmatpush.bf16.msra.mxu0 0
        %692 = vmatpush.bf16.msra.mxu0 %v680
        %693 = vmatpush.bf16.msra.mxu0 %v679
        %694 = vmatmul.bf16.gmra.mxu0 %v684
        %v695 = vpop.f32.mrf.mxu0
        %v696 = vadd.f32 0.0, %v695
        %v697 = vpop.f32.mrf.mxu0
        %698 = vdwg.mxu0
        %v699 = vadd.f32 %v607, %v696
        %700 = vrot.lane.b32.xlu0 %v429, 32
        %v701 = vpop.permute.xlu0 %700
        %702 = vrot.lane.b32.xlu0 %v430, 32
        %v703 = vpop.permute.xlu0 %702
        %v705 = vsel %vm432, %v701, 0
        %v708 = vsel %vm432, %v703, 0
        %710 = vmatpush.bf16.xpose.msra.mxu0 0
        %711 = vmatpush.bf16.xpose.msra.mxu0 0
        %712 = vmatpush.bf16.xpose.msra.mxu0 0
        %713 = vmatpush.bf16.xpose.msra.mxu0 0
        %714 = vmatpush.bf16.xpose.msra.mxu0 0
        %715 = vmatpush.bf16.xpose.msra.mxu0 0
        %716 = vmatpush.bf16.xpose.msra.mxu0 0
        %717 = vmatpush.bf16.xpose.msra.mxu0 %v708
        %718 = vmatmul.bf16.gmra.mxu0 %v705
        %v719 = vpop.f32.mrf.mxu0
        %v720 = vadd.f32 %v428, %v719
        %v721 = vpop.f32.mrf.mxu0
        %722 = vdwg.mxu0
        %v723 = vsel %vm452, %v720, -inf
        %724 = vmax.xlane.f32.xlu0 %v723
        %v725 = vpop.xlane.xlu0 %724
        %v726 = vsub.f32 %v720, %v725
        %v727 = vmul.f32 %v726, 1.442695
        %v728 = vpow.pop %v727
        %v729 = vsel %vm452, %v728, 0.0
        %730 = vadd.xlane.f32.xlu0 %v729
        %v731 = vpop.xlane.xlu0 %730
        %v732 = vrcp.pop %v731
        %v733 = vmul.f32 %v728, %v732
        %v734 = vpack.c.bf16 %v733, %v733
        %735 = vrot.lane.b32.xlu0 %v431, 32
        %v736 = vpop.permute.xlu0 %735
        %v738 = vsel %vm452, %v734, 0
        %v741 = vsel %vm468, %v736, 0
        %743 = vmatpush.bf16.msra.mxu0 0
        %744 = vmatpush.bf16.msra.mxu0 0
        %745 = vmatpush.bf16.msra.mxu0 0
        %746 = vmatpush.bf16.msra.mxu0 0
        %747 = vmatpush.bf16.msra.mxu0 0
        %748 = vmatpush.bf16.msra.mxu0 0
        %749 = vmatpush.bf16.msra.mxu0 0
        %750 = vmatpush.bf16.msra.mxu0 %v741
        %751 = vmatmul.bf16.gmra.mxu0 %v738
        %v752 = vpop.f32.mrf.mxu0
        %v753 = vadd.f32 0.0, %v752
        %v754 = vpop.f32.mrf.mxu0
        %755 = vdwg.mxu0
        %v756 = vpack.c.bf16 %v753, %v753
        %v757 = vld [vmem:[#allocation7 + $0x30] sm:$0xf]
        %v758 = vld [vmem:[#allocation7 + $0x34] sm:$0xf]
        %v759 = vld [vmem:[#allocation7 + $0x38] sm:$0xf]
        %v760 = vld [vmem:[#allocation7 + $0x3c] sm:$0xf]
        %v765 = vunpack.c.l.b16 %v757
        %v766 = vunpack.c.l.b16 %v758
        %v767 = vunpack.c.l.b16 %v759
        %v768 = vunpack.c.l.b16 %v760
        %v769 = vpack.c.b16 %v766, %v765
        %v770 = vpack.c.b16 %v768, %v767
        %v774 = vsel %vm432, %v756, 0
        %776 = vmatpush.bf16.msra.mxu0 0
        %777 = vmatpush.bf16.msra.mxu0 0
        %778 = vmatpush.bf16.msra.mxu0 0
        %779 = vmatpush.bf16.msra.mxu0 0
        %780 = vmatpush.bf16.msra.mxu0 0
        %781 = vmatpush.bf16.msra.mxu0 0
        %782 = vmatpush.bf16.msra.mxu0 %v770
        %783 = vmatpush.bf16.msra.mxu0 %v769
        %784 = vmatmul.bf16.gmra.mxu0 %v774
        %v785 = vpop.f32.mrf.mxu0
        %v786 = vadd.f32 0.0, %v785
        %v787 = vpop.f32.mrf.mxu0
        %788 = vdwg.mxu0
        %v789 = vadd.f32 %v699, %v786
        %790 = vst [vmem:[%s220] sm:$0xff] %v789
        %s791 = sand.u32 %s97, 1
        %s792 = scalar_lea.sflag [#allocation4], %s791
        %s793 = sand.u32 %s97, 1
        %s794 = smul.addr %s793, 8
        %s795 = scalar_lea.vmem [#allocation8], %s794
        // Predicated region
        $region45: #{tpu_custom_call.1} parent=31 // pred_check
          %p796 = pneg %p107
        $region46: #{tpu_custom_call.1} parent=31 // pred_check_branch
          %798 = sbr.rel (%p796) target = $region48
        $region47: #{tpu_custom_call.1} parent=31 // pred_region
          %800 = vsyncadd %s792, 0
          %s801 = smul.addr %s21, 8
          %s802 = scalar_lea.hbm %s3, %s801
          %s804 = sshll.u32 %s795, 4
          %s805 = int_to_ptr.vmem [resolvable:$true] %s804
          %s806 = sshll.u32 %s802, 4
          %s807 = int_to_ptr.hbm [resolvable:$true] %s806
          %809 = dma.vmem_to_hbm [thread:$0]  %s805, 128, %s807, %s792
        $region48: #{tpu_custom_call.1} parent=31 // pred_fallthru
          _
      $region32: #{tpu_custom_call.1} parent=5 // pred_fallthru
        _
      %p810 = scmp.le.s32.totalorder 2, %s16
      // Predicated region
      $region49: #{tpu_custom_call.1} parent=5 // pred_check
        %p811 = pneg %p810
      $region50: #{tpu_custom_call.1} parent=5 // pred_check_branch
        %813 = sbr.rel (%p811) target = $region52
      $region51: #{tpu_custom_call.1} parent=5 // pred_region
        %s814 = ssub.s32 %s16, 2
        // Predicated region
        $region53: #{tpu_custom_call.1} parent=51 // pred_check
          %p815 = pneg %p113
        $region54: #{tpu_custom_call.1} parent=51 // pred_check_branch
          %817 = sbr.rel (%p815) target = $region56
        $region55: #{tpu_custom_call.1} parent=51 // pred_region
          %s818 = sand.u32 %s98, 1
          %s819 = scalar_lea.sflag [#allocation4], %s818
          %s820 = sand.u32 %s98, 1
          %s821 = smul.addr %s820, 8
          %s822 = scalar_lea.vmem [#allocation8], %s821
          %824 = dma.done %s819, 128
        $region56: #{tpu_custom_call.1} parent=51 // pred_fallthru
          _
      $region52: #{tpu_custom_call.1} parent=5 // pred_fallthru
        _
    $region6: #{tpu_custom_call.1} parent=1 // loop_footer
      %s20 = sadd.s32 1, %s16
    $region7: #{tpu_custom_call.1} parent=1 // loop_footer_branch
      %15 = sbr.rel target = $region3
    $region8: #{tpu_custom_call.1} parent=1 // loop_exit
      _
    %825 = vsyncpa [#allocation3], 1
    %s826 = scalar_lea.sflag [#allocation3], 1
    %827 = vsyncpa %s826, 1
    %828 = vsyncpa [#allocation6], 1
    %829 = vsyncpa [#allocation4], 1
    %s830 = scalar_lea.sflag [#allocation4], 1
    %831 = vsyncpa %s830, 1

</llo_original>
